<compile_context>
chip_gen: v6e
topology: v6e:2x2x1
jax: 0.10.0
libtpu: 0.0.40
codegen_flags: <defaults>
</compile_context>

<pallas_src>
from functools import partial

import jax
import jax.numpy as jnp
from jax import lax
from jax.experimental import pallas as pl
from jax.experimental.pallas import tpu as pltpu

# ---- module hyper-parameters (from the PyTorch script) ----
block_size = 8     # max sequence length T
n_embd     = 32    # C
num_heads  = 4
head_size  = n_embd // num_heads   # 8  (concat of heads == n_embd)


def mha_kernel(x_ref, wqkv_ref, wp_ref, bp_ref, o_ref, *, seq_len, n_heads):
    """One batch block per grid step; all heads + both projections fused.

    x_ref    : (BB*T, C)  rows of BB batch elements, flattened over (b, t)
    wqkv_ref : (C, 3C)    fused [Wq^T * C**-0.5 | Wk^T | Wv^T]
    wp_ref   : (C, C)     output-projection weight, transposed (y = x @ wp + bp)
    bp_ref   : (1, C)     output-projection bias
    o_ref    : (BB*T, C)  output rows
    """
    rows, C = x_ref.shape             # static block shape
    T = seq_len
    BB = rows // T                    # batch elements in this block
    H = n_heads
    hs = C // H
    M = H * T                         # flattened (head, key-position) axis

    x = x_ref[...]

    # ---- fused QKV projection: one MXU push (C**-0.5 pre-folded into Wq) ----
    # (At production n_embd, cast x / weights to bf16 here for v6e/v7x MXU
    #  throughput; irrelevant at 16x32x96.)
    qkv = jnp.dot(x, wqkv_ref[...], preferred_element_type=jnp.float32)   # (rows, 3C)
    q = qkv[:, :C].reshape(BB, T, C)
    k = qkv[:, C:2 * C].reshape(BB, T, C)
    v = qkv[:, 2 * C:].reshape(BB, T, C)

    # ---- static masks, built once per invocation (iota + compares only) ----
    def seg_index(idx, seg_len):
        # idx // seg_len for idx < H*seg_len, via compares (no vector int div)
        out = jnp.zeros_like(idx)
        for h in range(1, H):
            out = out + (idx >= h * seg_len).astype(jnp.int32)
        return out

    # head selector in (m, c) space: m = h*T + j belongs to head m//T,
    # channel c belongs to head c//hs
    m_idx = lax.broadcasted_iota(jnp.int32, (M, C), 0)
    c_idx = lax.broadcasted_iota(jnp.int32, (M, C), 1)
    head_sel = seg_index(m_idx, T) == seg_index(c_idx, hs)          # (M, C)

    # causal mask in (query t, m) space: key position j = m % T
    t_idx = lax.broadcasted_iota(jnp.int32, (T, M), 0)
    m2 = lax.broadcasted_iota(jnp.int32, (T, M), 1)
    j_idx = m2 - T * seg_index(m2, T)                               # m % T
    causal = (j_idx <= t_idx)[None]                                 # (1, T, M)

    # block-ones matrix: sums each head's T-wide segment and spreads the sum
    # back across that segment (per-head softmax denominators, no shuffles)
    r_idx = lax.broadcasted_iota(jnp.int32, (M, M), 0)
    s_idx = lax.broadcasted_iota(jnp.int32, (M, M), 1)
    seg_sum = (seg_index(r_idx, T) == seg_index(s_idx, T)).astype(jnp.float32)

    # ---- block-diagonal (over heads) K and V slabs ----
    zero = jnp.float32(0)
    k_bd = jnp.where(head_sel[None], jnp.concatenate([k] * H, axis=1), zero)  # (BB, M, C)
    v_bd = jnp.where(head_sel[None], jnp.concatenate([v] * H, axis=1), zero)  # (BB, M, C)

    # ---- all-head scores: wei[b,t,h*T+j] = <q_h[b,t], k_h[b,j]> * C**-0.5 ----
    wei = jnp.einsum('btc,bmc->btm', q, k_bd,
                     preferred_element_type=jnp.float32)            # (BB, T, M)
    wei = jnp.where(causal, wei, -jnp.inf)

    # ---- per-head-segment softmax over the last axis ----
    # Subtracting the per-(b,t) max over ALL segments is softmax-invariant per
    # segment (constant in j); keeps reductions on the minor axis.  Masked
    # entries become exp(-inf) = 0.
    wei = wei - jnp.max(wei, axis=-1, keepdims=True)
    p = jnp.exp(wei)
    p_flat = p.reshape(rows, M)
    denom = jnp.dot(p_flat, seg_sum, preferred_element_type=jnp.float32)   # (rows, M)
    p_norm = (p_flat / denom).reshape(BB, T, M)                     # exact divide

    # ---- PV with block-diagonal V: directly the head-concatenated output ----
    cat = jnp.einsum('btm,bmc->btc', p_norm, v_bd,
                     preferred_element_type=jnp.float32).reshape(rows, C)

    # ---- output projection (one MXU push) + bias ----
    out = jnp.dot(cat, wp_ref[...], preferred_element_type=jnp.float32) + bp_ref[...]
    o_ref[...] = out.astype(o_ref.dtype)


def fuse_qkv_weights(wq, wk, wv, n_embd_):
    """Host-side, one-time: fuse [Wq^T | Wk^T | Wv^T] and fold C**-0.5 into Wq."""
    scale = jnp.asarray(n_embd_, jnp.float32) ** jnp.float32(-0.5)
    return jnp.concatenate([wq * scale, wk, wv], axis=1)          # (C, 3C)


def multi_head_attention(x, wqkv, wp, bp, *, batch_block=None):
    """x: (B, T, C).  wqkv: (C, 3C) fused, Q-scaled, pre-transposed for
    right-multiply.  wp: (C, C) transposed.  bp: (1, C).  Returns (B, T, C)."""
    B, T, C = x.shape

    if batch_block is None:
        # <=128 LHS rows keeps the M extent within a single v5e MXU pass; on
        # v7x (2 TensorCores/chip) cap bb so grid[0] >= 2 and the "parallel"
        # batch-block axis can shard across both cores.
        dk = jax.devices()[0].device_kind.lower()
        n_tc = 2 if ("v7" in dk or "7x" in dk) else 1
        max_bb = max(1, 128 // T)
        if n_tc > 1 and B >= n_tc:
            max_bb = min(max_bb, B // n_tc)
        bb = min(B, max_bb)
        while B % bb:
            bb -= 1
    else:
        bb = batch_block
    grid = (B // bb,)
    rows = bb * T

    # Per-step VMEM footprint (double-buffered inputs + output) must stay well
    # under the smallest scoped default (16 MiB on v5e); re-derive for v7x's
    # 64 MiB physical VMEM if this structure is reused at production n_embd.
    vmem_bytes = 2 * 4 * (rows * C + C * 3 * C + C * C + C + rows * C)
    assert vmem_bytes < 16 * 1024 * 1024, "tile too large: shrink batch_block"

    x_flat = x.reshape(B * T, C)      # (B*T, C) row slab, rows grouped by batch

    out_flat = pl.pallas_call(
        partial(mha_kernel, seq_len=T, n_heads=num_heads),
        out_shape=jax.ShapeDtypeStruct((B * T, C), jnp.float32),
        grid=grid,
        in_specs=[
            pl.BlockSpec((rows, C), lambda i: (i, 0)),      # x rows for this block
            pl.BlockSpec((C, 3 * C), lambda i: (0, 0)),     # fused qkv weight (resident)
            pl.BlockSpec((C, C), lambda i: (0, 0)),         # proj weight (resident)
            pl.BlockSpec((1, C), lambda i: (0, 0)),         # proj bias
        ],
        out_specs=pl.BlockSpec((rows, C), lambda i: (i, 0)),
        compiler_params=pltpu.CompilerParams(
            dimension_semantics=("parallel",)),             # batch-block axis
    )(x_flat, wqkv, wp, bp)
    return out_flat.reshape(B, T, C)


def reference_mha(x, wq, wk, wv, wp, bp):
    """Pure-JAX reference with identical semantics (correctness check)."""
    B, T, C = x.shape
    q = x @ wq
    k = x @ wk
    v = x @ wv
    scale = C ** -0.5
    mask = jnp.tril(jnp.ones((T, T), dtype=bool))
    outs = []
    for h in range(num_heads):
        sl = slice(h * head_size, (h + 1) * head_size)
        wei = (q[:, :, sl] @ jnp.swapaxes(k[:, :, sl], -2, -1)) * scale
        wei = jnp.where(mask[None], wei, -jnp.inf)
        wei = jax.nn.softmax(wei, axis=-1)
        outs.append(wei @ v[:, :, sl])
    cat = jnp.concatenate(outs, axis=-1)
    return cat @ wp + bp


if __name__ == "__main__":
    key = jax.random.PRNGKey(0)
    kx, kq, kk, kv, kp, kb = jax.random.split(key, 6)

    B, T, C = 2, block_size, n_embd   # (2, 8, 32)

    x = jax.random.normal(kx, (B, T, C), dtype=jnp.float32)

    # Deterministic synthetic parameters (shapes follow nn.Linear).
    # nn.Linear(n_embd, head_size, bias=False) has weight (hs, C) computing
    # x @ W^T; we pre-transpose and concatenate per-head weights along the
    # output axis so head h occupies columns h*hs:(h+1)*hs.
    def init_w(k_, shape, scale=0.1):
        return (scale * jax.random.normal(k_, shape)).astype(jnp.float32)

    wq = init_w(kq, (C, C))
    wk = init_w(kk, (C, C))
    wv = init_w(kv, (C, C))
    wp = init_w(kp, (C, C))            # proj weight, transposed
    bp = init_w(kb, (1, C))            # proj bias

    wqkv = fuse_qkv_weights(wq, wk, wv, C)   # (C, 3C), C**-0.5 folded into Wq

    out = multi_head_attention(x, wqkv, wp, bp)
    out = jax.block_until_ready(out)

    ref = reference_mha(x, wq, wk, wv, wp, bp)
    assert out.shape == (B, T, C)
    # Exact softmax divide in-kernel (approx-reciprocal removed); remaining
    # tolerance covers MXU f32 matmul pass behavior vs the XLA reference.
    assert jnp.allclose(out, ref, atol=5e-3, rtol=5e-3), "mismatch vs reference"

    print("KERNEL_OK")
</pallas_src>

<mosaic_0001>
module attributes {stable_mosaic.version = 11 : i64} {
  func.func @mha_kernel(%arg0: i32, %arg1: memref<16x32xf32, #tpu.memory_space<vmem>>, %arg2: memref<32x96xf32, #tpu.memory_space<vmem>>, %arg3: memref<32x32xf32, #tpu.memory_space<vmem>>, %arg4: memref<1x32xf32, #tpu.memory_space<vmem>>, %arg5: memref<16x32xf32, #tpu.memory_space<vmem>>) attributes {dimension_semantics = [#tpu.dimension_semantics<parallel>], iteration_bounds = array<i64: 1>, scalar_prefetch = 0 : i64, scratch_operands = 0 : i64, tpu.core_type = #tpu.core_type<tc>, window_params = [{transform_indices = @transform_0, window_bounds = array<i64: 16, 32>}, {pipeline_mode = #tpu.pipeline_mode<synchronous>, transform_indices = @transform_1, window_bounds = array<i64: 32, 96>}, {pipeline_mode = #tpu.pipeline_mode<synchronous>, transform_indices = @transform_2, window_bounds = array<i64: 32, 32>}, {pipeline_mode = #tpu.pipeline_mode<synchronous>, transform_indices = @transform_3, window_bounds = array<i64: 1, 32>}, {transform_indices = @transform_4, window_bounds = array<i64: 16, 32>}]} {
    %c0 = arith.constant 0 : index
    %c0_0 = arith.constant 0 : index
    %0 = vector.load %arg1[%c0, %c0_0] : memref<16x32xf32, #tpu.memory_space<vmem>>, vector<16x32xf32>
    %c0_1 = arith.constant 0 : index
    %c0_2 = arith.constant 0 : index
    %1 = vector.load %arg2[%c0_1, %c0_2] : memref<32x96xf32, #tpu.memory_space<vmem>>, vector<32x96xf32>
    %cst = arith.constant dense<0.000000e+00> : vector<16x96xf32>
    %2 = tpu.matmul %0, %1, %cst {dimension_numbers = #tpu.dot_dimension_numbers<[1], [0], [0], [1], [0, 0, 1, 1], [], []>} : vector<16x32xf32>, vector<32x96xf32>, vector<16x96xf32> -> vector<16x96xf32>
    %3 = vector.extract_strided_slice %2 {offsets = [0, 0], sizes = [16, 32], strides = [1, 1]} : vector<16x96xf32> to vector<16x32xf32>
    %4 = vector.shape_cast %3 : vector<16x32xf32> to vector<2x8x32xf32>
    %5 = vector.extract_strided_slice %2 {offsets = [0, 32], sizes = [16, 32], strides = [1, 1]} : vector<16x96xf32> to vector<16x32xf32>
    %6 = vector.shape_cast %5 : vector<16x32xf32> to vector<2x8x32xf32>
    %7 = vector.extract_strided_slice %2 {offsets = [0, 64], sizes = [16, 32], strides = [1, 1]} : vector<16x96xf32> to vector<16x32xf32>
    %8 = vector.shape_cast %7 : vector<16x32xf32> to vector<2x8x32xf32>
    %9 = tpu.iota {dimensions = array<i32: 0>} : vector<32x32xi32>
    %10 = tpu.iota {dimensions = array<i32: 1>} : vector<32x32xi32>
    %c0_i32 = arith.constant 0 : i32
    %11 = vector.broadcast %c0_i32 : i32 to vector<32x32xi32>
    %c8_i32 = arith.constant 8 : i32
    %12 = vector.broadcast %c8_i32 : i32 to vector<32x32xi32>
    %13 = arith.cmpi sge, %9, %12 : vector<32x32xi32>
    %14 = arith.extui %13 : vector<32x32xi1> to vector<32x32xi32>
    %15 = arith.addi %11, %14 : vector<32x32xi32>
    %c16_i32 = arith.constant 16 : i32
    %16 = vector.broadcast %c16_i32 : i32 to vector<32x32xi32>
    %17 = arith.cmpi sge, %9, %16 : vector<32x32xi32>
    %18 = arith.extui %17 : vector<32x32xi1> to vector<32x32xi32>
    %19 = arith.addi %15, %18 : vector<32x32xi32>
    %c24_i32 = arith.constant 24 : i32
    %20 = vector.broadcast %c24_i32 : i32 to vector<32x32xi32>
    %21 = arith.cmpi sge, %9, %20 : vector<32x32xi32>
    %22 = arith.extui %21 : vector<32x32xi1> to vector<32x32xi32>
    %23 = arith.addi %19, %22 : vector<32x32xi32>
    %c0_i32_3 = arith.constant 0 : i32
    %24 = vector.broadcast %c0_i32_3 : i32 to vector<32x32xi32>
    %c8_i32_4 = arith.constant 8 : i32
    %25 = vector.broadcast %c8_i32_4 : i32 to vector<32x32xi32>
    %26 = arith.cmpi sge, %10, %25 : vector<32x32xi32>
    %27 = arith.extui %26 : vector<32x32xi1> to vector<32x32xi32>
    %28 = arith.addi %24, %27 : vector<32x32xi32>
    %c16_i32_5 = arith.constant 16 : i32
    %29 = vector.broadcast %c16_i32_5 : i32 to vector<32x32xi32>
    %30 = arith.cmpi sge, %10, %29 : vector<32x32xi32>
    %31 = arith.extui %30 : vector<32x32xi1> to vector<32x32xi32>
    %32 = arith.addi %28, %31 : vector<32x32xi32>
    %c24_i32_6 = arith.constant 24 : i32
    %33 = vector.broadcast %c24_i32_6 : i32 to vector<32x32xi32>
    %34 = arith.cmpi sge, %10, %33 : vector<32x32xi32>
    %35 = arith.extui %34 : vector<32x32xi1> to vector<32x32xi32>
    %36 = arith.addi %32, %35 : vector<32x32xi32>
    %37 = arith.cmpi eq, %23, %36 : vector<32x32xi32>
    %38 = tpu.iota {dimensions = array<i32: 0>} : vector<8x32xi32>
    %39 = tpu.iota {dimensions = array<i32: 1>} : vector<8x32xi32>
    %c0_i32_7 = arith.constant 0 : i32
    %40 = vector.broadcast %c0_i32_7 : i32 to vector<8x32xi32>
    %c8_i32_8 = arith.constant 8 : i32
    %41 = vector.broadcast %c8_i32_8 : i32 to vector<8x32xi32>
    %42 = arith.cmpi sge, %39, %41 : vector<8x32xi32>
    %43 = arith.extui %42 : vector<8x32xi1> to vector<8x32xi32>
    %44 = arith.addi %40, %43 : vector<8x32xi32>
    %c16_i32_9 = arith.constant 16 : i32
    %45 = vector.broadcast %c16_i32_9 : i32 to vector<8x32xi32>
    %46 = arith.cmpi sge, %39, %45 : vector<8x32xi32>
    %47 = arith.extui %46 : vector<8x32xi1> to vector<8x32xi32>
    %48 = arith.addi %44, %47 : vector<8x32xi32>
    %c24_i32_10 = arith.constant 24 : i32
    %49 = vector.broadcast %c24_i32_10 : i32 to vector<8x32xi32>
    %50 = arith.cmpi sge, %39, %49 : vector<8x32xi32>
    %51 = arith.extui %50 : vector<8x32xi1> to vector<8x32xi32>
    %52 = arith.addi %48, %51 : vector<8x32xi32>
    %c8_i32_11 = arith.constant 8 : i32
    %53 = vector.broadcast %c8_i32_11 : i32 to vector<8x32xi32>
    %54 = arith.muli %53, %52 : vector<8x32xi32>
    %55 = arith.subi %39, %54 : vector<8x32xi32>
    %56 = arith.cmpi sle, %55, %38 : vector<8x32xi32>
    %57 = vector.shape_cast %56 : vector<8x32xi1> to vector<1x8x32xi1>
    %58 = tpu.iota {dimensions = array<i32: 0>} : vector<32x32xi32>
    %59 = tpu.iota {dimensions = array<i32: 1>} : vector<32x32xi32>
    %c0_i32_12 = arith.constant 0 : i32
    %60 = vector.broadcast %c0_i32_12 : i32 to vector<32x32xi32>
    %c8_i32_13 = arith.constant 8 : i32
    %61 = vector.broadcast %c8_i32_13 : i32 to vector<32x32xi32>
    %62 = arith.cmpi sge, %58, %61 : vector<32x32xi32>
    %63 = arith.extui %62 : vector<32x32xi1> to vector<32x32xi32>
    %64 = arith.addi %60, %63 : vector<32x32xi32>
    %c16_i32_14 = arith.constant 16 : i32
    %65 = vector.broadcast %c16_i32_14 : i32 to vector<32x32xi32>
    %66 = arith.cmpi sge, %58, %65 : vector<32x32xi32>
    %67 = arith.extui %66 : vector<32x32xi1> to vector<32x32xi32>
    %68 = arith.addi %64, %67 : vector<32x32xi32>
    %c24_i32_15 = arith.constant 24 : i32
    %69 = vector.broadcast %c24_i32_15 : i32 to vector<32x32xi32>
    %70 = arith.cmpi sge, %58, %69 : vector<32x32xi32>
    %71 = arith.extui %70 : vector<32x32xi1> to vector<32x32xi32>
    %72 = arith.addi %68, %71 : vector<32x32xi32>
    %c0_i32_16 = arith.constant 0 : i32
    %73 = vector.broadcast %c0_i32_16 : i32 to vector<32x32xi32>
    %c8_i32_17 = arith.constant 8 : i32
    %74 = vector.broadcast %c8_i32_17 : i32 to vector<32x32xi32>
    %75 = arith.cmpi sge, %59, %74 : vector<32x32xi32>
    %76 = arith.extui %75 : vector<32x32xi1> to vector<32x32xi32>
    %77 = arith.addi %73, %76 : vector<32x32xi32>
    %c16_i32_18 = arith.constant 16 : i32
    %78 = vector.broadcast %c16_i32_18 : i32 to vector<32x32xi32>
    %79 = arith.cmpi sge, %59, %78 : vector<32x32xi32>
    %80 = arith.extui %79 : vector<32x32xi1> to vector<32x32xi32>
    %81 = arith.addi %77, %80 : vector<32x32xi32>
    %c24_i32_19 = arith.constant 24 : i32
    %82 = vector.broadcast %c24_i32_19 : i32 to vector<32x32xi32>
    %83 = arith.cmpi sge, %59, %82 : vector<32x32xi32>
    %84 = arith.extui %83 : vector<32x32xi1> to vector<32x32xi32>
    %85 = arith.addi %81, %84 : vector<32x32xi32>
    %86 = arith.cmpi eq, %72, %85 : vector<32x32xi32>
    %87 = arith.extui %86 : vector<32x32xi1> to vector<32x32xi32>
    %88 = arith.sitofp %87 : vector<32x32xi32> to vector<32x32xf32>
    %89 = vector.shape_cast %37 : vector<32x32xi1> to vector<1x32x32xi1>
    %90 = tpu.concatenate %6, %6, %6, %6 in 1 : vector<2x8x32xf32>, vector<2x8x32xf32>, vector<2x8x32xf32>, vector<2x8x32xf32> -> vector<2x32x32xf32>
    %cst_20 = arith.constant 0.000000e+00 : f32
    %91 = vector.shape_cast %89 : vector<1x32x32xi1> to vector<1x32x32xi1>
    %92 = vector.broadcast %91 : vector<1x32x32xi1> to vector<2x32x32xi1>
    %93 = vector.broadcast %cst_20 : f32 to vector<2x32x32xf32>
    %94 = arith.select %92, %90, %93 : vector<2x32x32xi1>, vector<2x32x32xf32>
    %95 = vector.shape_cast %37 : vector<32x32xi1> to vector<1x32x32xi1>
    %96 = tpu.concatenate %8, %8, %8, %8 in 1 : vector<2x8x32xf32>, vector<2x8x32xf32>, vector<2x8x32xf32>, vector<2x8x32xf32> -> vector<2x32x32xf32>
    %cst_21 = arith.constant 0.000000e+00 : f32
    %97 = vector.shape_cast %95 : vector<1x32x32xi1> to vector<1x32x32xi1>
    %98 = vector.broadcast %97 : vector<1x32x32xi1> to vector<2x32x32xi1>
    %99 = vector.broadcast %cst_21 : f32 to vector<2x32x32xf32>
    %100 = arith.select %98, %96, %99 : vector<2x32x32xi1>, vector<2x32x32xf32>
    "tpu.trace_start"() <{level = 10 : i32, message = "btc,bmc->btm"}> : () -> ()
    %cst_22 = arith.constant dense<0.000000e+00> : vector<2x8x32xf32>
    %101 = tpu.matmul %4, %94, %cst_22 {dimension_numbers = #tpu.dot_dimension_numbers<[2], [2], [1], [1], [0, 0, 0, 1, 1, 1], [0], [0]>} : vector<2x8x32xf32>, vector<2x32x32xf32>, vector<2x8x32xf32> -> vector<2x8x32xf32>
    %cst_23 = arith.constant 0xFF800000 : f32
    "tpu.trace_stop"() : () -> ()
    %102 = vector.shape_cast %57 : vector<1x8x32xi1> to vector<1x8x32xi1>
    %103 = vector.broadcast %102 : vector<1x8x32xi1> to vector<2x8x32xi1>
    %104 = vector.broadcast %cst_23 : f32 to vector<2x8x32xf32>
    %105 = arith.select %103, %101, %104 : vector<2x8x32xi1>, vector<2x8x32xf32>
    %cst_24 = arith.constant dense<0xFF800000> : vector<2x8xf32>
    %106 = vector.multi_reduction <maximumf>, %105, %cst_24 [2] : vector<2x8x32xf32> to vector<2x8xf32>
    %107 = vector.shape_cast %106 : vector<2x8xf32> to vector<2x8x1xf32>
    %108 = vector.broadcast %107 : vector<2x8x1xf32> to vector<2x8x32xf32>
    %109 = arith.subf %105, %108 : vector<2x8x32xf32>
    %110 = math.exp %109 : vector<2x8x32xf32>
    %111 = vector.shape_cast %110 : vector<2x8x32xf32> to vector<16x32xf32>
    %cst_25 = arith.constant dense<0.000000e+00> : vector<16x32xf32>
    %112 = tpu.matmul %111, %88, %cst_25 {dimension_numbers = #tpu.dot_dimension_numbers<[1], [0], [0], [1], [0, 0, 1, 1], [], []>} : vector<16x32xf32>, vector<32x32xf32>, vector<16x32xf32> -> vector<16x32xf32>
    %113 = arith.divf %111, %112 : vector<16x32xf32>
    %114 = vector.shape_cast %113 : vector<16x32xf32> to vector<2x8x32xf32>
    "tpu.trace_start"() <{level = 10 : i32, message = "btm,bmc->btc"}> : () -> ()
    %cst_26 = arith.constant dense<0.000000e+00> : vector<2x8x32xf32>
    %115 = tpu.matmul %114, %100, %cst_26 {dimension_numbers = #tpu.dot_dimension_numbers<[2], [1], [1], [2], [0, 0, 0, 1, 1, 2], [0], [0]>} : vector<2x8x32xf32>, vector<2x32x32xf32>, vector<2x8x32xf32> -> vector<2x8x32xf32>
    "tpu.trace_stop"() : () -> ()
    %116 = vector.shape_cast %115 : vector<2x8x32xf32> to vector<16x32xf32>
    %c0_27 = arith.constant 0 : index
    %c0_28 = arith.constant 0 : index
    %117 = vector.load %arg3[%c0_27, %c0_28] : memref<32x32xf32, #tpu.memory_space<vmem>>, vector<32x32xf32>
    %cst_29 = arith.constant dense<0.000000e+00> : vector<16x32xf32>
    %118 = tpu.matmul %116, %117, %cst_29 {dimension_numbers = #tpu.dot_dimension_numbers<[1], [0], [0], [1], [0, 0, 1, 1], [], []>} : vector<16x32xf32>, vector<32x32xf32>, vector<16x32xf32> -> vector<16x32xf32>
    %c0_30 = arith.constant 0 : index
    %c0_31 = arith.constant 0 : index
    %119 = vector.load %arg4[%c0_30, %c0_31] : memref<1x32xf32, #tpu.memory_space<vmem>>, vector<1x32xf32>
    %120 = vector.broadcast %119 : vector<1x32xf32> to vector<16x32xf32>
    %121 = arith.addf %118, %120 : vector<16x32xf32>
    %c0_32 = arith.constant 0 : index
    %c0_33 = arith.constant 0 : index
    %122 = vector.load %arg5[%c0_32, %c0_33] : memref<16x32xf32, #tpu.memory_space<vmem>>, vector<16x32xf32>
    tpu.vector_store %arg5[%c0_32, %c0_33], %121 {strides = array<i32>} : memref<16x32xf32, #tpu.memory_space<vmem>>, vector<16x32xf32>,
    return
  }
  func.func @transform_0(%arg0: i32) -> (i32, i32) {
    %c0_i32 = arith.constant 0 : i32
    %c0_i32_0 = arith.constant 0 : i32
    return %arg0, %c0_i32 : i32, i32
  }
  func.func @transform_1(%arg0: i32) -> (i32, i32) {
    %c0_i32 = arith.constant 0 : i32
    %c0_i32_0 = arith.constant 0 : i32
    %c0_i32_1 = arith.constant 0 : i32
    return %c0_i32, %c0_i32_0 : i32, i32
  }
  func.func @transform_2(%arg0: i32) -> (i32, i32) {
    %c0_i32 = arith.constant 0 : i32
    %c0_i32_0 = arith.constant 0 : i32
    %c0_i32_1 = arith.constant 0 : i32
    return %c0_i32, %c0_i32_0 : i32, i32
  }
  func.func @transform_3(%arg0: i32) -> (i32, i32) {
    %c0_i32 = arith.constant 0 : i32
    %c0_i32_0 = arith.constant 0 : i32
    %c0_i32_1 = arith.constant 0 : i32
    return %c0_i32, %c0_i32_0 : i32, i32
  }
  func.func @transform_4(%arg0: i32) -> (i32, i32) {
    %c0_i32 = arith.constant 0 : i32
    %c0_i32_0 = arith.constant 0 : i32
    return %arg0, %c0_i32 : i32, i32
  }
}

</mosaic_0001>

<llo_original>
// kernel: tpu_custom_call.1
$region0: #{tpu_custom_call.1}
  #allocation0 [shape = 'u32[]', space=smem, size = 0x4, offset = 0x4, fixed_abs, tag = 'smem constant byte address 0x4 - core index']
  #allocation1 [shape = 'u32[144,128]{1,0:T(1,128)}', space=vmem, size = 0x12000, scoped, tag = 'internal scratch']
  %s0 = inlined_call_operand.hbm [shape: f32[16,32], index: 0, kind: input, shape index: {}]
  %s1 = inlined_call_operand.hbm [shape: f32[32,96], index: 1, kind: input, shape index: {}]
  %s2 = inlined_call_operand.hbm [shape: f32[32,32], index: 2, kind: input, shape index: {}]
  %s3 = inlined_call_operand.vmem [shape: f32[1,32], index: 3, kind: input, shape index: {}]
  %s4 = inlined_call_operand.hbm [shape: f32[16,32], index: 4, kind: output, shape index: {}]
  %s5 = sld [smem:[#allocation0]]
  $region38: #{tpu_custom_call.1} parent=0
    _
  %s7 = ssub.s32 1, %s5
  %s8 = scalar_select 0, %s7, %s5
  $region1: #{tpu_custom_call.1} parent=0
    #allocation2 [shape = 'u8[8192]{0}', space=vmem, size = 0x2000, scoped, tag = 'input window, operand 0, single buffered']
    #allocation3 [shape = 's32[1]{0}', space=sflag, size = 0x4, scoped, tag = 'scoped memory for tpu_custom_call.1']
    #allocation4 [shape = 's32[1]{0}', space=sflag, size = 0x4, scoped, tag = 'scoped memory for tpu_custom_call.1']
    #allocation5 [shape = 'u8[16384]{0}', space=vmem, size = 0x4000, scoped, tag = 'input window, operand 1, single buffered']
    #allocation6 [shape = 's32[1]{0}', space=sflag, size = 0x4, scoped, tag = 'scoped memory for tpu_custom_call.1']
    #allocation7 [shape = 'u8[16384]{0}', space=vmem, size = 0x4000, scoped, tag = 'input window, operand 2, single buffered']
    #allocation8 [shape = 'u8[8192]{0}', space=vmem, size = 0x2000, scoped, tag = 'output window, operand 0, single buffered']
    %9 = vsyncpa [#allocation3], 0
    %10 = vsyncpa [#allocation6], 0
    %11 = vsyncpa [#allocation4], 0
    // Predicated region
    $region2: #{tpu_custom_call.1} parent=1 // pred_check
      _
    $region3: #{tpu_custom_call.1} parent=1 // pred_check_branch
      %13 = sbr.rel (0) target = $region5
    $region4: #{tpu_custom_call.1} parent=1 // pred_region
      %s15 = ssub.s32 256, 256
      %16 = vsyncadd [#allocation3], %s15
      %s17 = sshll.u32 [#allocation2], 4
      %s18 = int_to_ptr.vmem [resolvable:$true] %s17
      %23 = dma.hbm_to_vmem [thread:$0]  %s0, 256, %s18, [#allocation3], 128, 128, 8
    $region5: #{tpu_custom_call.1} parent=1 // pred_fallthru
      _
    // Predicated region
    $region6: #{tpu_custom_call.1} parent=1 // pred_check
      _
    $region7: #{tpu_custom_call.1} parent=1 // pred_check_branch
      %25 = sbr.rel (0) target = $region9
    $region8: #{tpu_custom_call.1} parent=1 // pred_region
      %s27 = ssub.s32 512, 512
      %28 = vsyncadd [#allocation6], %s27
      %s29 = sshll.u32 [#allocation5], 4
      %s30 = int_to_ptr.vmem [resolvable:$true] %s29
      %35 = dma.hbm_to_vmem [thread:$0]  %s1, 512, %s30, [#allocation6], 128, 128, 8
    $region9: #{tpu_custom_call.1} parent=1 // pred_fallthru
      _
    // Predicated region
    $region10: #{tpu_custom_call.1} parent=1 // pred_check
      _
    $region11: #{tpu_custom_call.1} parent=1 // pred_check_branch
      %37 = sbr.rel (0) target = $region13
    $region12: #{tpu_custom_call.1} parent=1 // pred_region
      %s39 = ssub.s32 512, 512
      %40 = vsyncadd [#allocation6], %s39
      %s41 = sshll.u32 [#allocation7], 4
      %s42 = int_to_ptr.vmem [resolvable:$true] %s41
      %47 = dma.hbm_to_vmem [thread:$0]  %s2, 512, %s42, [#allocation6], 128, 128, 8
    $region13: #{tpu_custom_call.1} parent=1 // pred_fallthru
      _
    // Predicated region
    $region14: #{tpu_custom_call.1} parent=1 // pred_check
      _
    $region15: #{tpu_custom_call.1} parent=1 // pred_check_branch
      %49 = sbr.rel (0) target = $region17
    $region16: #{tpu_custom_call.1} parent=1 // pred_region
      _
    $region17: #{tpu_custom_call.1} parent=1 // pred_fallthru
      _
    // Predicated region
    $region18: #{tpu_custom_call.1} parent=1 // pred_check
      _
    $region19: #{tpu_custom_call.1} parent=1 // pred_check_branch
      %51 = sbr.rel (0) target = $region21
    $region20: #{tpu_custom_call.1} parent=1 // pred_region
      %52 = dma.done [#allocation3], 256
    $region21: #{tpu_custom_call.1} parent=1 // pred_fallthru
      _
    // Predicated region
    $region22: #{tpu_custom_call.1} parent=1 // pred_check
      _
    $region23: #{tpu_custom_call.1} parent=1 // pred_check_branch
      %54 = sbr.rel (0) target = $region25
    $region24: #{tpu_custom_call.1} parent=1 // pred_region
      %55 = dma.done [#allocation6], 512
    $region25: #{tpu_custom_call.1} parent=1 // pred_fallthru
      _
    // Predicated region
    $region26: #{tpu_custom_call.1} parent=1 // pred_check
      _
    $region27: #{tpu_custom_call.1} parent=1 // pred_check_branch
      %57 = sbr.rel (0) target = $region29
    $region28: #{tpu_custom_call.1} parent=1 // pred_region
      %58 = dma.done [#allocation6], 512
    $region29: #{tpu_custom_call.1} parent=1 // pred_fallthru
      _
    %v59 = vld [vmem:[#allocation2] sm:$0xff]
    %v60 = vld [vmem:[#allocation2 + $0x8] sm:$0xff]
    %v61 = vld [vmem:[#allocation5] sm:$0xff]
    %v62 = vld [vmem:[#allocation5 + $0x8] sm:$0xff]
    %v63 = vld [vmem:[#allocation5 + $0x10] sm:$0xff]
    %v64 = vld [vmem:[#allocation5 + $0x18] sm:$0xff]
    %vm65 = vcmask 261120
    %v67 = vsel %vm65, %v59, 0
    %v70 = vsel %vm65, %v60, 0
    %72 = vmatprep.subr.mxu0 0.0
    %73 = vmatpush1.msra.mxu0 0.0
    %74 = vmatprep.subr.mxu0 0.0
    %75 = vmatpush1.msra.mxu0 0.0
    %76 = vmatprep.subr.mxu0 0.0
    %77 = vmatpush1.msra.mxu0 0.0
    %78 = vmatprep.subr.mxu0 0.0
    %79 = vmatpush1.msra.mxu0 0.0
    %80 = vmatprep.subr.mxu0 0.0
    %81 = vmatpush1.msra.mxu0 0.0
    %82 = vmatprep.subr.mxu0 0.0
    %83 = vmatpush1.msra.mxu0 0.0
    %84 = vmatprep.subr.mxu0 0.0
    %85 = vmatpush1.msra.mxu0 0.0
    %86 = vmatprep.subr.mxu0 0.0
    %87 = vmatpush1.msra.mxu0 0.0
    %88 = vmatprep.subr.mxu0 0.0
    %89 = vmatpush1.msra.mxu0 0.0
    %90 = vmatprep.subr.mxu0 0.0
    %91 = vmatpush1.msra.mxu0 0.0
    %92 = vmatprep.subr.mxu0 0.0
    %93 = vmatpush1.msra.mxu0 0.0
    %94 = vmatprep.subr.mxu0 0.0
    %95 = vmatpush1.msra.mxu0 0.0
    %96 = vmatprep.subr.mxu0 0.0
    %97 = vmatpush1.msra.mxu0 %v64
    %98 = vmatprep.subr.mxu0 0.0
    %99 = vmatpush1.msra.mxu0 %v63
    %100 = vmatprep.subr.mxu0 0.0
    %101 = vmatpush1.msra.mxu0 %v62
    %102 = vmatprep.subr.mxu0 0.0
    %103 = vmatpush1.msra.mxu0 %v61
    %104 = vmatprep.subr.mxu0 0.0
    %105 = vmatpush2.msra.mxu0 0.0
    %106 = vmatprep.subr.mxu0 0.0
    %107 = vmatpush2.msra.mxu0 0.0
    %108 = vmatprep.subr.mxu0 0.0
    %109 = vmatpush2.msra.mxu0 0.0
    %110 = vmatprep.subr.mxu0 0.0
    %111 = vmatpush2.msra.mxu0 0.0
    %112 = vmatprep.subr.mxu0 0.0
    %113 = vmatpush2.msra.mxu0 0.0
    %114 = vmatprep.subr.mxu0 0.0
    %115 = vmatpush2.msra.mxu0 0.0
    %116 = vmatprep.subr.mxu0 0.0
    %117 = vmatpush2.msra.mxu0 0.0
    %118 = vmatprep.subr.mxu0 0.0
    %119 = vmatpush2.msra.mxu0 0.0
    %120 = vmatprep.subr.mxu0 0.0
    %121 = vmatpush2.msra.mxu0 0.0
    %122 = vmatprep.subr.mxu0 0.0
    %123 = vmatpush2.msra.mxu0 0.0
    %124 = vmatprep.subr.mxu0 0.0
    %125 = vmatpush2.msra.mxu0 0.0
    %126 = vmatprep.subr.mxu0 0.0
    %127 = vmatpush2.msra.mxu0 0.0
    %128 = vmatprep.subr.mxu0 0.0
    %129 = vmatpush2.msra.mxu0 0.0
    %130 = vmatprep.subr.mxu0 0.0
    %131 = vmatpush2.msra.mxu0 0.0
    %132 = vmatprep.subr.mxu0 0.0
    %133 = vmatpush2.msra.mxu0 0.0
    %134 = vmatprep.subr.mxu0 0.0
    %135 = vmatpush2.msra.mxu0 0.0
    %136 = vmatprep.mubr.f32.mxu0 0.0
    %137 = vmatmul.mubr.f32.gmra.mxu0 %v67
    %v138 = vpop.f32.mrf.mxu0
    %v139 = vadd.f32 0.0, %v138
    %v140 = vpop.f32.mrf.mxu0
    %141 = vmatprep.mubr.f32.mxu0 0.0
    %142 = vmatmul.mubr.f32.gmra.mxu0 %v70
    %v143 = vpop.f32.mrf.mxu0
    %v144 = vadd.f32 0.0, %v143
    %v145 = vpop.f32.mrf.mxu0
    %146 = vdwg.mxu0
    %v147 = vlaneseq
    %v148 = vshrl.u32 %v147, 7
    %v149 = vadd.s32 %v148, 8
    %v150 = vadd.s32 %v148, 16
    %v151 = vadd.s32 %v148, 24
    %v152 = vlaneseq
    %v153 = vand.u32 %v152, 127
    %vm154 = vcmp.ge.s32.totalorder %v148, 8
    %vm155 = vcmp.ge.s32.totalorder %v149, 8
    %vm156 = vcmp.ge.s32.totalorder %v150, 8
    %vm157 = vcmp.ge.s32.totalorder %v151, 8
    %v158 = vsel %vm154, 1, 0
    %v159 = vsel %vm155, 1, 0
    %v160 = vsel %vm156, 1, 0
    %v161 = vsel %vm157, 1, 0
    %vm162 = vcmp.ge.s32.totalorder %v148, 16
    %vm163 = vcmp.ge.s32.totalorder %v149, 16
    %vm164 = vcmp.ge.s32.totalorder %v150, 16
    %vm165 = vcmp.ge.s32.totalorder %v151, 16
    %v166 = vsel %vm162, 1, 0
    %v167 = vsel %vm163, 1, 0
    %v168 = vsel %vm164, 1, 0
    %v169 = vsel %vm165, 1, 0
    %v170 = vadd.s32 %v158, %v166
    %v171 = vadd.s32 %v159, %v167
    %v172 = vadd.s32 %v160, %v168
    %v173 = vadd.s32 %v161, %v169
    %vm174 = vcmp.ge.s32.totalorder %v148, 24
    %vm175 = vcmp.ge.s32.totalorder %v149, 24
    %vm176 = vcmp.ge.s32.totalorder %v150, 24
    %vm177 = vcmp.ge.s32.totalorder %v151, 24
    %v178 = vsel %vm174, 1, 0
    %v179 = vsel %vm175, 1, 0
    %v180 = vsel %vm176, 1, 0
    %v181 = vsel %vm177, 1, 0
    %v182 = vadd.s32 %v170, %v178
    %v183 = vadd.s32 %v171, %v179
    %v184 = vadd.s32 %v172, %v180
    %v185 = vadd.s32 %v173, %v181
    %vm186 = vcmp.ge.s32.totalorder %v153, 8
    %v187 = vsel %vm186, 1, 0
    %vm188 = vcmp.ge.s32.totalorder %v153, 16
    %v189 = vsel %vm188, 1, 0
    %v190 = vadd.s32 %v187, %v189
    %vm191 = vcmp.ge.s32.totalorder %v153, 24
    %v192 = vsel %vm191, 1, 0
    %v193 = vadd.s32 %v190, %v192
    %vm194 = vcmp.eq.s32.totalorder %v182, %v193
    %vm195 = vcmp.eq.s32.totalorder %v183, %v193
    %vm196 = vcmp.eq.s32.totalorder %v184, %v193
    %vm197 = vcmp.eq.s32.totalorder %v185, %v193
    %v198 = vmul.u32 %v193, 8
    %v199 = vsub.s32 %v153, %v198
    %vm200 = vcmp.le.s32.totalorder %v199, %v148
    %v201 = vsel %vm194, 1, 0
    %v202 = vsel %vm195, 1, 0
    %v203 = vsel %vm196, 1, 0
    %v204 = vsel %vm197, 1, 0
    %v205 = vcvt.s32.f32 %v201
    %v206 = vcvt.s32.f32 %v202
    %v207 = vcvt.s32.f32 %v203
    %v208 = vcvt.s32.f32 %v204
    %vm209 = vcmp.eq.s32.totalorder %v201, 1
    %vm210 = vcmp.eq.s32.totalorder %v202, 1
    %vm211 = vcmp.eq.s32.totalorder %v203, 1
    %vm212 = vcmp.eq.s32.totalorder %v204, 1
    %215 = vrot.lane.b32.xlu0 %v139, 96
    %v216 = vpop.permute.xlu0 %215
    %217 = vrot.lane.b32.xlu0 %v144, 96
    %v218 = vpop.permute.xlu0 %217
    %v221 = vsel %vm209, %v216, 0.0
    %v222 = vsel %vm210, %v216, 0.0
    %v223 = vsel %vm211, %v216, 0.0
    %v224 = vsel %vm212, %v216, 0.0
    %v225 = vsel %vm209, %v218, 0.0
    %v226 = vsel %vm210, %v218, 0.0
    %v227 = vsel %vm211, %v218, 0.0
    %v228 = vsel %vm212, %v218, 0.0
    %229 = vrot.lane.b32.xlu0 %v139, 64
    %v230 = vpop.permute.xlu0 %229
    %231 = vrot.lane.b32.xlu0 %v144, 64
    %v232 = vpop.permute.xlu0 %231
    %v235 = vsel %vm209, %v230, 0.0
    %v236 = vsel %vm210, %v230, 0.0
    %v237 = vsel %vm211, %v230, 0.0
    %v238 = vsel %vm212, %v230, 0.0
    %v239 = vsel %vm209, %v232, 0.0
    %v240 = vsel %vm210, %v232, 0.0
    %v241 = vsel %vm211, %v232, 0.0
    %v242 = vsel %vm212, %v232, 0.0
    %v243 = vsel %vm65, %v139, 0
    %v246 = vsel %vm65, %v221, 0
    %v249 = vsel %vm65, %v222, 0
    %v252 = vsel %vm65, %v223, 0
    %v255 = vsel %vm65, %v224, 0
    %257 = vmatprep.subr.mxu0 0.0
    %258 = vmatpush1.xpose.msra.mxu0 0.0
    %259 = vmatprep.subr.mxu0 0.0
    %260 = vmatpush1.xpose.msra.mxu0 0.0
    %261 = vmatprep.subr.mxu0 0.0
    %262 = vmatpush1.xpose.msra.mxu0 0.0
    %263 = vmatprep.subr.mxu0 0.0
    %264 = vmatpush1.xpose.msra.mxu0 0.0
    %265 = vmatprep.subr.mxu0 0.0
    %266 = vmatpush1.xpose.msra.mxu0 0.0
    %267 = vmatprep.subr.mxu0 0.0
    %268 = vmatpush1.xpose.msra.mxu0 0.0
    %269 = vmatprep.subr.mxu0 0.0
    %270 = vmatpush1.xpose.msra.mxu0 0.0
    %271 = vmatprep.subr.mxu0 0.0
    %272 = vmatpush1.xpose.msra.mxu0 0.0
    %273 = vmatprep.subr.mxu0 0.0
    %274 = vmatpush1.xpose.msra.mxu0 0.0
    %275 = vmatprep.subr.mxu0 0.0
    %276 = vmatpush1.xpose.msra.mxu0 0.0
    %277 = vmatprep.subr.mxu0 0.0
    %278 = vmatpush1.xpose.msra.mxu0 0.0
    %279 = vmatprep.subr.mxu0 0.0
    %280 = vmatpush1.xpose.msra.mxu0 0.0
    %281 = vmatprep.subr.mxu0 0.0
    %282 = vmatpush1.xpose.msra.mxu0 %v255
    %283 = vmatprep.subr.mxu0 0.0
    %284 = vmatpush1.xpose.msra.mxu0 %v252
    %285 = vmatprep.subr.mxu0 0.0
    %286 = vmatpush1.xpose.msra.mxu0 %v249
    %287 = vmatprep.subr.mxu0 0.0
    %288 = vmatpush1.xpose.msra.mxu0 %v246
    %289 = vmatprep.subr.mxu0 0.0
    %290 = vmatpush2.xpose.msra.mxu0 0.0
    %291 = vmatprep.subr.mxu0 0.0
    %292 = vmatpush2.xpose.msra.mxu0 0.0
    %293 = vmatprep.subr.mxu0 0.0
    %294 = vmatpush2.xpose.msra.mxu0 0.0
    %295 = vmatprep.subr.mxu0 0.0
    %296 = vmatpush2.xpose.msra.mxu0 0.0
    %297 = vmatprep.subr.mxu0 0.0
    %298 = vmatpush2.xpose.msra.mxu0 0.0
    %299 = vmatprep.subr.mxu0 0.0
    %300 = vmatpush2.xpose.msra.mxu0 0.0
    %301 = vmatprep.subr.mxu0 0.0
    %302 = vmatpush2.xpose.msra.mxu0 0.0
    %303 = vmatprep.subr.mxu0 0.0
    %304 = vmatpush2.xpose.msra.mxu0 0.0
    %305 = vmatprep.subr.mxu0 0.0
    %306 = vmatpush2.xpose.msra.mxu0 0.0
    %307 = vmatprep.subr.mxu0 0.0
    %308 = vmatpush2.xpose.msra.mxu0 0.0
    %309 = vmatprep.subr.mxu0 0.0
    %310 = vmatpush2.xpose.msra.mxu0 0.0
    %311 = vmatprep.subr.mxu0 0.0
    %312 = vmatpush2.xpose.msra.mxu0 0.0
    %313 = vmatprep.subr.mxu0 0.0
    %314 = vmatpush2.xpose.msra.mxu0 0.0
    %315 = vmatprep.subr.mxu0 0.0
    %316 = vmatpush2.xpose.msra.mxu0 0.0
    %317 = vmatprep.subr.mxu0 0.0
    %318 = vmatpush2.xpose.msra.mxu0 0.0
    %319 = vmatprep.subr.mxu0 0.0
    %320 = vmatpush2.xpose.msra.mxu0 0.0
    %321 = vmatprep.mubr.f32.mxu0 0.0
    %322 = vmatmul.mubr.f32.gmra.mxu0 %v243
    %v323 = vpop.f32.mrf.mxu0
    %v324 = vadd.f32 0.0, %v323
    %v325 = vpop.f32.mrf.mxu0
    %326 = vdwg.mxu0
    %v327 = vsel %vm65, %v144, 0
    %v330 = vsel %vm65, %v225, 0
    %v333 = vsel %vm65, %v226, 0
    %v336 = vsel %vm65, %v227, 0
    %v339 = vsel %vm65, %v228, 0
    %341 = vmatprep.subr.mxu0 0.0
    %342 = vmatpush1.xpose.msra.mxu0 0.0
    %343 = vmatprep.subr.mxu0 0.0
    %344 = vmatpush1.xpose.msra.mxu0 0.0
    %345 = vmatprep.subr.mxu0 0.0
    %346 = vmatpush1.xpose.msra.mxu0 0.0
    %347 = vmatprep.subr.mxu0 0.0
    %348 = vmatpush1.xpose.msra.mxu0 0.0
    %349 = vmatprep.subr.mxu0 0.0
    %350 = vmatpush1.xpose.msra.mxu0 0.0
    %351 = vmatprep.subr.mxu0 0.0
    %352 = vmatpush1.xpose.msra.mxu0 0.0
    %353 = vmatprep.subr.mxu0 0.0
    %354 = vmatpush1.xpose.msra.mxu0 0.0
    %355 = vmatprep.subr.mxu0 0.0
    %356 = vmatpush1.xpose.msra.mxu0 0.0
    %357 = vmatprep.subr.mxu0 0.0
    %358 = vmatpush1.xpose.msra.mxu0 0.0
    %359 = vmatprep.subr.mxu0 0.0
    %360 = vmatpush1.xpose.msra.mxu0 0.0
    %361 = vmatprep.subr.mxu0 0.0
    %362 = vmatpush1.xpose.msra.mxu0 0.0
    %363 = vmatprep.subr.mxu0 0.0
    %364 = vmatpush1.xpose.msra.mxu0 0.0
    %365 = vmatprep.subr.mxu0 0.0
    %366 = vmatpush1.xpose.msra.mxu0 %v339
    %367 = vmatprep.subr.mxu0 0.0
    %368 = vmatpush1.xpose.msra.mxu0 %v336
    %369 = vmatprep.subr.mxu0 0.0
    %370 = vmatpush1.xpose.msra.mxu0 %v333
    %371 = vmatprep.subr.mxu0 0.0
    %372 = vmatpush1.xpose.msra.mxu0 %v330
    %373 = vmatprep.subr.mxu0 0.0
    %374 = vmatpush2.xpose.msra.mxu0 0.0
    %375 = vmatprep.subr.mxu0 0.0
    %376 = vmatpush2.xpose.msra.mxu0 0.0
    %377 = vmatprep.subr.mxu0 0.0
    %378 = vmatpush2.xpose.msra.mxu0 0.0
    %379 = vmatprep.subr.mxu0 0.0
    %380 = vmatpush2.xpose.msra.mxu0 0.0
    %381 = vmatprep.subr.mxu0 0.0
    %382 = vmatpush2.xpose.msra.mxu0 0.0
    %383 = vmatprep.subr.mxu0 0.0
    %384 = vmatpush2.xpose.msra.mxu0 0.0
    %385 = vmatprep.subr.mxu0 0.0
    %386 = vmatpush2.xpose.msra.mxu0 0.0
    %387 = vmatprep.subr.mxu0 0.0
    %388 = vmatpush2.xpose.msra.mxu0 0.0
    %389 = vmatprep.subr.mxu0 0.0
    %390 = vmatpush2.xpose.msra.mxu0 0.0
    %391 = vmatprep.subr.mxu0 0.0
    %392 = vmatpush2.xpose.msra.mxu0 0.0
    %393 = vmatprep.subr.mxu0 0.0
    %394 = vmatpush2.xpose.msra.mxu0 0.0
    %395 = vmatprep.subr.mxu0 0.0
    %396 = vmatpush2.xpose.msra.mxu0 0.0
    %397 = vmatprep.subr.mxu0 0.0
    %398 = vmatpush2.xpose.msra.mxu0 0.0
    %399 = vmatprep.subr.mxu0 0.0
    %400 = vmatpush2.xpose.msra.mxu0 0.0
    %401 = vmatprep.subr.mxu0 0.0
    %402 = vmatpush2.xpose.msra.mxu0 0.0
    %403 = vmatprep.subr.mxu0 0.0
    %404 = vmatpush2.xpose.msra.mxu0 0.0
    %405 = vmatprep.mubr.f32.mxu0 0.0
    %406 = vmatmul.mubr.f32.gmra.mxu0 %v327
    %v407 = vpop.f32.mrf.mxu0
    %v408 = vadd.f32 0.0, %v407
    %v409 = vpop.f32.mrf.mxu0
    %410 = vdwg.mxu0
    %v411 = vsel %vm200, 1, 0
    %vm412 = vcmp.eq.s32.totalorder %v411, 1
    %v413 = vsel %vm412, %v324, -inf
    %v414 = vsel %vm412, %v408, -inf
    %v415 = vsel %vm65, %v413, -inf
    %416 = vmax.xlane.f32.xlu0 %v415
    %v417 = vpop.xlane.xlu0 %416
    %v418 = vsel %vm65, %v414, -inf
    %419 = vmax.xlane.f32.xlu0 %v418
    %v420 = vpop.xlane.xlu0 %419
    %v421 = vsub.f32 %v413, %v417
    %v422 = vsub.f32 %v414, %v420
    %v423 = vmul.f32 %v421, 1.442695
    %v424 = vpow.pop %v423
    %v425 = vmul.f32 %v422, 1.442695
    %v426 = vpow.pop %v425
    %v428 = vsel %vm65, %v424, 0
    %v431 = vsel %vm65, %v426, 0
    %433 = vmatprep.subr.mxu0 0.0
    %434 = vmatpush1.msra.mxu0 0.0
    %435 = vmatprep.subr.mxu0 0.0
    %436 = vmatpush1.msra.mxu0 0.0
    %437 = vmatprep.subr.mxu0 0.0
    %438 = vmatpush1.msra.mxu0 0.0
    %439 = vmatprep.subr.mxu0 0.0
    %440 = vmatpush1.msra.mxu0 0.0
    %441 = vmatprep.subr.mxu0 0.0
    %442 = vmatpush1.msra.mxu0 0.0
    %443 = vmatprep.subr.mxu0 0.0
    %444 = vmatpush1.msra.mxu0 0.0
    %445 = vmatprep.subr.mxu0 0.0
    %446 = vmatpush1.msra.mxu0 0.0
    %447 = vmatprep.subr.mxu0 0.0
    %448 = vmatpush1.msra.mxu0 0.0
    %449 = vmatprep.subr.mxu0 0.0
    %450 = vmatpush1.msra.mxu0 0.0
    %451 = vmatprep.subr.mxu0 0.0
    %452 = vmatpush1.msra.mxu0 0.0
    %453 = vmatprep.subr.mxu0 0.0
    %454 = vmatpush1.msra.mxu0 0.0
    %455 = vmatprep.subr.mxu0 0.0
    %456 = vmatpush1.msra.mxu0 0.0
    %457 = vmatprep.subr.mxu0 0.0
    %458 = vmatpush1.msra.mxu0 %v208
    %459 = vmatprep.subr.mxu0 0.0
    %460 = vmatpush1.msra.mxu0 %v207
    %461 = vmatprep.subr.mxu0 0.0
    %462 = vmatpush1.msra.mxu0 %v206
    %463 = vmatprep.subr.mxu0 0.0
    %464 = vmatpush1.msra.mxu0 %v205
    %465 = vmatprep.subr.mxu0 0.0
    %466 = vmatpush2.msra.mxu0 0.0
    %467 = vmatprep.subr.mxu0 0.0
    %468 = vmatpush2.msra.mxu0 0.0
    %469 = vmatprep.subr.mxu0 0.0
    %470 = vmatpush2.msra.mxu0 0.0
    %471 = vmatprep.subr.mxu0 0.0
    %472 = vmatpush2.msra.mxu0 0.0
    %473 = vmatprep.subr.mxu0 0.0
    %474 = vmatpush2.msra.mxu0 0.0
    %475 = vmatprep.subr.mxu0 0.0
    %476 = vmatpush2.msra.mxu0 0.0
    %477 = vmatprep.subr.mxu0 0.0
    %478 = vmatpush2.msra.mxu0 0.0
    %479 = vmatprep.subr.mxu0 0.0
    %480 = vmatpush2.msra.mxu0 0.0
    %481 = vmatprep.subr.mxu0 0.0
    %482 = vmatpush2.msra.mxu0 0.0
    %483 = vmatprep.subr.mxu0 0.0
    %484 = vmatpush2.msra.mxu0 0.0
    %485 = vmatprep.subr.mxu0 0.0
    %486 = vmatpush2.msra.mxu0 0.0
    %487 = vmatprep.subr.mxu0 0.0
    %488 = vmatpush2.msra.mxu0 0.0
    %489 = vmatprep.subr.mxu0 0.0
    %490 = vmatpush2.msra.mxu0 0.0
    %491 = vmatprep.subr.mxu0 0.0
    %492 = vmatpush2.msra.mxu0 0.0
    %493 = vmatprep.subr.mxu0 0.0
    %494 = vmatpush2.msra.mxu0 0.0
    %495 = vmatprep.subr.mxu0 0.0
    %496 = vmatpush2.msra.mxu0 0.0
    %497 = vmatprep.mubr.f32.mxu0 0.0
    %498 = vmatmul.mubr.f32.gmra.mxu0 %v428
    %v499 = vpop.f32.mrf.mxu0
    %v500 = vadd.f32 0.0, %v499
    %v501 = vpop.f32.mrf.mxu0
    %502 = vmatprep.mubr.f32.mxu0 0.0
    %503 = vmatmul.mubr.f32.gmra.mxu0 %v431
    %v504 = vpop.f32.mrf.mxu0
    %v505 = vadd.f32 0.0, %v504
    %v506 = vpop.f32.mrf.mxu0
    %507 = vdwg.mxu0
    %v508 = vrcp.pop %v500
    %v509 = vmul.f32 %v424, %v508
    %v510 = vrcp.pop %v505
    %v511 = vmul.f32 %v426, %v510
    %v513 = vsel %vm65, %v509, 0
    %515 = vmatprep.subr.mxu0 0.0
    %516 = vmatpush1.msra.mxu0 0.0
    %517 = vmatprep.subr.mxu0 0.0
    %518 = vmatpush1.msra.mxu0 0.0
    %519 = vmatprep.subr.mxu0 0.0
    %520 = vmatpush1.msra.mxu0 0.0
    %521 = vmatprep.subr.mxu0 0.0
    %522 = vmatpush1.msra.mxu0 0.0
    %523 = vmatprep.subr.mxu0 0.0
    %524 = vmatpush1.msra.mxu0 0.0
    %525 = vmatprep.subr.mxu0 0.0
    %526 = vmatpush1.msra.mxu0 0.0
    %527 = vmatprep.subr.mxu0 0.0
    %528 = vmatpush1.msra.mxu0 0.0
    %529 = vmatprep.subr.mxu0 0.0
    %530 = vmatpush1.msra.mxu0 0.0
    %531 = vmatprep.subr.mxu0 0.0
    %532 = vmatpush1.msra.mxu0 0.0
    %533 = vmatprep.subr.mxu0 0.0
    %534 = vmatpush1.msra.mxu0 0.0
    %535 = vmatprep.subr.mxu0 0.0
    %536 = vmatpush1.msra.mxu0 0.0
    %537 = vmatprep.subr.mxu0 0.0
    %538 = vmatpush1.msra.mxu0 0.0
    %539 = vmatprep.subr.mxu0 0.0
    %540 = vmatpush1.msra.mxu0 %v238
    %541 = vmatprep.subr.mxu0 0.0
    %542 = vmatpush1.msra.mxu0 %v237
    %543 = vmatprep.subr.mxu0 0.0
    %544 = vmatpush1.msra.mxu0 %v236
    %545 = vmatprep.subr.mxu0 0.0
    %546 = vmatpush1.msra.mxu0 %v235
    %547 = vmatprep.subr.mxu0 0.0
    %548 = vmatpush2.msra.mxu0 0.0
    %549 = vmatprep.subr.mxu0 0.0
    %550 = vmatpush2.msra.mxu0 0.0
    %551 = vmatprep.subr.mxu0 0.0
    %552 = vmatpush2.msra.mxu0 0.0
    %553 = vmatprep.subr.mxu0 0.0
    %554 = vmatpush2.msra.mxu0 0.0
    %555 = vmatprep.subr.mxu0 0.0
    %556 = vmatpush2.msra.mxu0 0.0
    %557 = vmatprep.subr.mxu0 0.0
    %558 = vmatpush2.msra.mxu0 0.0
    %559 = vmatprep.subr.mxu0 0.0
    %560 = vmatpush2.msra.mxu0 0.0
    %561 = vmatprep.subr.mxu0 0.0
    %562 = vmatpush2.msra.mxu0 0.0
    %563 = vmatprep.subr.mxu0 0.0
    %564 = vmatpush2.msra.mxu0 0.0
    %565 = vmatprep.subr.mxu0 0.0
    %566 = vmatpush2.msra.mxu0 0.0
    %567 = vmatprep.subr.mxu0 0.0
    %568 = vmatpush2.msra.mxu0 0.0
    %569 = vmatprep.subr.mxu0 0.0
    %570 = vmatpush2.msra.mxu0 0.0
    %571 = vmatprep.subr.mxu0 0.0
    %572 = vmatpush2.msra.mxu0 0.0
    %573 = vmatprep.subr.mxu0 0.0
    %574 = vmatpush2.msra.mxu0 0.0
    %575 = vmatprep.subr.mxu0 0.0
    %576 = vmatpush2.msra.mxu0 0.0
    %577 = vmatprep.subr.mxu0 0.0
    %578 = vmatpush2.msra.mxu0 0.0
    %579 = vmatprep.mubr.f32.mxu0 0.0
    %580 = vmatmul.mubr.f32.gmra.mxu0 %v513
    %v581 = vpop.f32.mrf.mxu0
    %v582 = vadd.f32 0.0, %v581
    %v583 = vpop.f32.mrf.mxu0
    %584 = vdwg.mxu0
    %v586 = vsel %vm65, %v511, 0
    %588 = vmatprep.subr.mxu0 0.0
    %589 = vmatpush1.msra.mxu0 0.0
    %590 = vmatprep.subr.mxu0 0.0
    %591 = vmatpush1.msra.mxu0 0.0
    %592 = vmatprep.subr.mxu0 0.0
    %593 = vmatpush1.msra.mxu0 0.0
    %594 = vmatprep.subr.mxu0 0.0
    %595 = vmatpush1.msra.mxu0 0.0
    %596 = vmatprep.subr.mxu0 0.0
    %597 = vmatpush1.msra.mxu0 0.0
    %598 = vmatprep.subr.mxu0 0.0
    %599 = vmatpush1.msra.mxu0 0.0
    %600 = vmatprep.subr.mxu0 0.0
    %601 = vmatpush1.msra.mxu0 0.0
    %602 = vmatprep.subr.mxu0 0.0
    %603 = vmatpush1.msra.mxu0 0.0
    %604 = vmatprep.subr.mxu0 0.0
    %605 = vmatpush1.msra.mxu0 0.0
    %606 = vmatprep.subr.mxu0 0.0
    %607 = vmatpush1.msra.mxu0 0.0
    %608 = vmatprep.subr.mxu0 0.0
    %609 = vmatpush1.msra.mxu0 0.0
    %610 = vmatprep.subr.mxu0 0.0
    %611 = vmatpush1.msra.mxu0 0.0
    %612 = vmatprep.subr.mxu0 0.0
    %613 = vmatpush1.msra.mxu0 %v242
    %614 = vmatprep.subr.mxu0 0.0
    %615 = vmatpush1.msra.mxu0 %v241
    %616 = vmatprep.subr.mxu0 0.0
    %617 = vmatpush1.msra.mxu0 %v240
    %618 = vmatprep.subr.mxu0 0.0
    %619 = vmatpush1.msra.mxu0 %v239
    %620 = vmatprep.subr.mxu0 0.0
    %621 = vmatpush2.msra.mxu0 0.0
    %622 = vmatprep.subr.mxu0 0.0
    %623 = vmatpush2.msra.mxu0 0.0
    %624 = vmatprep.subr.mxu0 0.0
    %625 = vmatpush2.msra.mxu0 0.0
    %626 = vmatprep.subr.mxu0 0.0
    %627 = vmatpush2.msra.mxu0 0.0
    %628 = vmatprep.subr.mxu0 0.0
    %629 = vmatpush2.msra.mxu0 0.0
    %630 = vmatprep.subr.mxu0 0.0
    %631 = vmatpush2.msra.mxu0 0.0
    %632 = vmatprep.subr.mxu0 0.0
    %633 = vmatpush2.msra.mxu0 0.0
    %634 = vmatprep.subr.mxu0 0.0
    %635 = vmatpush2.msra.mxu0 0.0
    %636 = vmatprep.subr.mxu0 0.0
    %637 = vmatpush2.msra.mxu0 0.0
    %638 = vmatprep.subr.mxu0 0.0
    %639 = vmatpush2.msra.mxu0 0.0
    %640 = vmatprep.subr.mxu0 0.0
    %641 = vmatpush2.msra.mxu0 0.0
    %642 = vmatprep.subr.mxu0 0.0
    %643 = vmatpush2.msra.mxu0 0.0
    %644 = vmatprep.subr.mxu0 0.0
    %645 = vmatpush2.msra.mxu0 0.0
    %646 = vmatprep.subr.mxu0 0.0
    %647 = vmatpush2.msra.mxu0 0.0
    %648 = vmatprep.subr.mxu0 0.0
    %649 = vmatpush2.msra.mxu0 0.0
    %650 = vmatprep.subr.mxu0 0.0
    %651 = vmatpush2.msra.mxu0 0.0
    %652 = vmatprep.mubr.f32.mxu0 0.0
    %653 = vmatmul.mubr.f32.gmra.mxu0 %v586
    %v654 = vpop.f32.mrf.mxu0
    %v655 = vadd.f32 0.0, %v654
    %v656 = vpop.f32.mrf.mxu0
    %657 = vdwg.mxu0
    %v658 = vld [vmem:[#allocation7] sm:$0xff]
    %v659 = vld [vmem:[#allocation7 + $0x8] sm:$0xff]
    %v660 = vld [vmem:[#allocation7 + $0x10] sm:$0xff]
    %v661 = vld [vmem:[#allocation7 + $0x18] sm:$0xff]
    %v662 = vld [vmem:[%s3] sm:$0x1]
    %v664 = vlaneseq
    %v665 = vshrl.u32 %v664, 7
    %v666 = vsub.s32 0, %v665
    %v667 = vrot.slane %v662, %v666
    %v670 = vsel %vm65, %v582, 0
    %v673 = vsel %vm65, %v655, 0
    %675 = vmatprep.subr.mxu0 0.0
    %676 = vmatpush1.msra.mxu0 0.0
    %677 = vmatprep.subr.mxu0 0.0
    %678 = vmatpush1.msra.mxu0 0.0
    %679 = vmatprep.subr.mxu0 0.0
    %680 = vmatpush1.msra.mxu0 0.0
    %681 = vmatprep.subr.mxu0 0.0
    %682 = vmatpush1.msra.mxu0 0.0
    %683 = vmatprep.subr.mxu0 0.0
    %684 = vmatpush1.msra.mxu0 0.0
    %685 = vmatprep.subr.mxu0 0.0
    %686 = vmatpush1.msra.mxu0 0.0
    %687 = vmatprep.subr.mxu0 0.0
    %688 = vmatpush1.msra.mxu0 0.0
    %689 = vmatprep.subr.mxu0 0.0
    %690 = vmatpush1.msra.mxu0 0.0
    %691 = vmatprep.subr.mxu0 0.0
    %692 = vmatpush1.msra.mxu0 0.0
    %693 = vmatprep.subr.mxu0 0.0
    %694 = vmatpush1.msra.mxu0 0.0
    %695 = vmatprep.subr.mxu0 0.0
    %696 = vmatpush1.msra.mxu0 0.0
    %697 = vmatprep.subr.mxu0 0.0
    %698 = vmatpush1.msra.mxu0 0.0
    %699 = vmatprep.subr.mxu0 0.0
    %700 = vmatpush1.msra.mxu0 %v661
    %701 = vmatprep.subr.mxu0 0.0
    %702 = vmatpush1.msra.mxu0 %v660
    %703 = vmatprep.subr.mxu0 0.0
    %704 = vmatpush1.msra.mxu0 %v659
    %705 = vmatprep.subr.mxu0 0.0
    %706 = vmatpush1.msra.mxu0 %v658
    %707 = vmatprep.subr.mxu0 0.0
    %708 = vmatpush2.msra.mxu0 0.0
    %709 = vmatprep.subr.mxu0 0.0
    %710 = vmatpush2.msra.mxu0 0.0
    %711 = vmatprep.subr.mxu0 0.0
    %712 = vmatpush2.msra.mxu0 0.0
    %713 = vmatprep.subr.mxu0 0.0
    %714 = vmatpush2.msra.mxu0 0.0
    %715 = vmatprep.subr.mxu0 0.0
    %716 = vmatpush2.msra.mxu0 0.0
    %717 = vmatprep.subr.mxu0 0.0
    %718 = vmatpush2.msra.mxu0 0.0
    %719 = vmatprep.subr.mxu0 0.0
    %720 = vmatpush2.msra.mxu0 0.0
    %721 = vmatprep.subr.mxu0 0.0
    %722 = vmatpush2.msra.mxu0 0.0
    %723 = vmatprep.subr.mxu0 0.0
    %724 = vmatpush2.msra.mxu0 0.0
    %725 = vmatprep.subr.mxu0 0.0
    %726 = vmatpush2.msra.mxu0 0.0
    %727 = vmatprep.subr.mxu0 0.0
    %728 = vmatpush2.msra.mxu0 0.0
    %729 = vmatprep.subr.mxu0 0.0
    %730 = vmatpush2.msra.mxu0 0.0
    %731 = vmatprep.subr.mxu0 0.0
    %732 = vmatpush2.msra.mxu0 0.0
    %733 = vmatprep.subr.mxu0 0.0
    %734 = vmatpush2.msra.mxu0 0.0
    %735 = vmatprep.subr.mxu0 0.0
    %736 = vmatpush2.msra.mxu0 0.0
    %737 = vmatprep.subr.mxu0 0.0
    %738 = vmatpush2.msra.mxu0 0.0
    %739 = vmatprep.mubr.f32.mxu0 0.0
    %740 = vmatmul.mubr.f32.gmra.mxu0 %v670
    %v741 = vpop.f32.mrf.mxu0
    %v742 = vadd.f32 %v667, %v741
    %v743 = vpop.f32.mrf.mxu0
    %744 = vmatprep.mubr.f32.mxu0 0.0
    %745 = vmatmul.mubr.f32.gmra.mxu0 %v673
    %v746 = vpop.f32.mrf.mxu0
    %v747 = vadd.f32 %v667, %v746
    %v748 = vpop.f32.mrf.mxu0
    %749 = vdwg.mxu0
    %750 = vst.msk [vmem:[#allocation8] sm:$0xff] %vm65, %v742
    %751 = vst.msk [vmem:[#allocation8 + $0x8] sm:$0xff] %vm65, %v747
    // Predicated region
    $region30: #{tpu_custom_call.1} parent=1 // pred_check
      _
    $region31: #{tpu_custom_call.1} parent=1 // pred_check_branch
      %753 = sbr.rel (0) target = $region33
    $region32: #{tpu_custom_call.1} parent=1 // pred_region
      %s755 = ssub.s32 256, 256
      %756 = vsyncadd [#allocation4], %s755
      %s757 = sshll.u32 [#allocation8], 4
      %s758 = int_to_ptr.vmem [resolvable:$true] %s757
      %763 = dma.vmem_to_hbm [thread:$0]  %s758, 256, %s4, [#allocation4], 128, 128, 8
    $region33: #{tpu_custom_call.1} parent=1 // pred_fallthru
      _
    // Predicated region
    $region34: #{tpu_custom_call.1} parent=1 // pred_check
      _
    $region35: #{tpu_custom_call.1} parent=1 // pred_check_branch
      %765 = sbr.rel (0) target = $region37
    $region36: #{tpu_custom_call.1} parent=1 // pred_region
      %766 = dma.done [#allocation4], 256
    $region37: #{tpu_custom_call.1} parent=1 // pred_fallthru
      _
    %767 = vsyncpa [#allocation3], 1
    %768 = vsyncpa [#allocation6], 1
    %769 = vsyncpa [#allocation4], 1

</llo_original>
